<compile_context>
chip_gen: v7x
topology: tpu7x:2x2x1
jax: 0.10.0
libtpu: 0.0.40
codegen_flags: <defaults>
</compile_context>

<pallas_src>
import functools

import jax
import jax.numpy as jnp
from jax.experimental import pallas as pl
from jax.experimental.pallas import tpu as pltpu


def _listmle_tile_kernel(x_ref, out_ref, *, total_rows):
    # x_ref:  (TB, L) tile of y_pred rows (f32 or bf16) in VMEM
    # out_ref: (1, 1, 1) f32 -- this tile's partial sum of per-row losses
    x = x_ref[...].astype(jnp.float32)                      # exact upcast for bf16
    tb, list_size = x.shape

    # single-pass formulation: -sum(log_softmax(x)) = L*logsumexp(x) - sum(x)
    m = jnp.max(x, axis=1, keepdims=True)                   # (TB, 1)   XLU
    z = jnp.sum(jnp.exp(x - m), axis=1, keepdims=True)      # EUP + XLU
    lse = m + jnp.log(z)                                    # (TB, 1)
    row_sum = jnp.sum(x, axis=1, keepdims=True)             # (TB, 1)
    row_loss = jnp.float32(list_size) * lse - row_sum       # (TB, 1)

    # mask rows past the true batch size (padded tail of the last tile)
    row0 = pl.program_id(0) * tb
    rid = row0 + jax.lax.broadcasted_iota(jnp.int32, (tb, 1), 0)
    row_loss = jnp.where(rid < total_rows, row_loss, 0.0)

    out_ref[...] = jnp.sum(row_loss).reshape(1, 1, 1)


def _pick_tile_rows(batch: int, list_size: int, itemsize: int) -> int:
    # ~2 MiB per tile (x2 for double buffering) keeps VMEM comfortable on all
    # of v5e/v6e/v7x, while up to 512 rows amortizes per-grid-step overhead.
    cap = max(8, ((2 * 1024 * 1024) // max(1, list_size * itemsize)) // 8 * 8)
    tb = min(512, cap)
    if batch <= tb:
        return batch      # single tile; block == full array dim is always legal
    return tb             # multiple of 8; last partial tile is masked in-kernel


def list_mle_loss(y_pred: jax.Array, y_true: jax.Array, *,
                  apply_rank_gather: bool = False) -> jax.Array:
    """ListMLE loss matching the PyTorch reference forward pass (scalar f32)."""
    if y_pred.ndim == 1 and y_true.ndim == 1:
        y_pred = y_pred[None, :]
        y_true = y_true[None, :]

    # PyTorch does y_pred.float(); bf16 is kept on the wire (half the HBM
    # bytes) and upcast in-kernel, which is numerically identical.
    if y_pred.dtype not in (jnp.float32, jnp.bfloat16):
        y_pred = y_pred.astype(jnp.float32)

    if apply_rank_gather:
        # Pure permutation of the list dim; numerically a no-op for this
        # full-row log_softmax formulation. Kept only for strict parity.
        true_rank = jnp.argsort(-y_true.astype(jnp.float32), axis=1)
        y_pred = jnp.take_along_axis(y_pred, true_rank, axis=1)

    batch, list_size = y_pred.shape
    tb = _pick_tile_rows(batch, list_size, y_pred.dtype.itemsize)
    num_tiles = (batch + tb - 1) // tb

    partials = pl.pallas_call(
        functools.partial(_listmle_tile_kernel, total_rows=batch),
        out_shape=jax.ShapeDtypeStruct((num_tiles, 1, 1), jnp.float32),
        grid_spec=pltpu.PrefetchScalarGridSpec(
            num_scalar_prefetch=0,
            grid=(num_tiles,),
            in_specs=[pl.BlockSpec((tb, list_size), lambda i: (i, 0))],
            out_specs=pl.BlockSpec((1, 1, 1), lambda i: (i, 0, 0)),
        ),
        compiler_params=pltpu.CompilerParams(
            dimension_semantics=("parallel",),
        ),
    )(y_pred)

    # mean over batch: multiply by the compile-time constant 1/B
    return jnp.sum(partials) * jnp.float32(1.0 / batch)


def _reference_loss(y_pred, y_true):
    # pure-JAX mirror of the PyTorch module (including the sort/gather)
    if y_pred.ndim == 1:
        y_pred = y_pred[None, :]
        y_true = y_true[None, :]
    y_pred = y_pred.astype(jnp.float32)
    y_true = y_true.astype(jnp.float32)
    rank = jnp.argsort(-y_true, axis=1)
    ps = jnp.take_along_axis(y_pred, rank, axis=1)
    logsm = jax.nn.log_softmax(ps, axis=1)
    return -jnp.sum(logsm, axis=1).mean()


if __name__ == "__main__":
    key = jax.random.PRNGKey(0)
    k1, k2, k3, k4 = jax.random.split(key, 4)

    # case 1: small 2-D batch (batch=8, list=128)
    y_pred = jax.random.normal(k1, (8, 128), dtype=jnp.float32)
    y_true = jax.random.normal(k2, (8, 128), dtype=jnp.float32)
    loss = jax.block_until_ready(list_mle_loss(y_pred, y_true))
    ref = _reference_loss(y_pred, y_true)
    assert jnp.allclose(loss, ref, rtol=1e-4, atol=1e-4), (loss, ref)

    # case 2: multi-tile batch with a masked partial tail (700 % 512 != 0)
    yp2 = jax.random.normal(k3, (700, 128), dtype=jnp.float32)
    yt2 = jax.random.normal(k4, (700, 128), dtype=jnp.float32)
    loss2 = jax.block_until_ready(list_mle_loss(yp2, yt2))
    ref2 = _reference_loss(yp2, yt2)
    assert jnp.allclose(loss2, ref2, rtol=1e-4, atol=1e-4), (loss2, ref2)

    # case 3: 1-D input path (the unsqueeze branch of the reference)
    yp3 = jax.random.normal(k1, (64,), dtype=jnp.float32)
    yt3 = jax.random.normal(k2, (64,), dtype=jnp.float32)
    loss3 = jax.block_until_ready(list_mle_loss(yp3, yt3))
    ref3 = _reference_loss(yp3, yt3)
    assert jnp.allclose(loss3, ref3, rtol=1e-4, atol=1e-4), (loss3, ref3)

    print("KERNEL_OK")
</pallas_src>

<mosaic_0001>
module attributes {stable_mosaic.version = 11 : i64} {
  func.func @_listmle_tile_kernel(%arg0: i32, %arg1: memref<8x128xf32, #tpu.memory_space<vmem>>, %arg2: memref<1x1x1xf32, #tpu.memory_space<vmem>>) attributes {dimension_semantics = [#tpu.dimension_semantics<parallel>], iteration_bounds = array<i64: 1>, scalar_prefetch = 0 : i64, scratch_operands = 0 : i64, tpu.core_type = #tpu.core_type<tc>, window_params = [{transform_indices = @transform_0, window_bounds = array<i64: 8, 128>}, {transform_indices = @transform_1, window_bounds = array<i64: 1, 1, 1>}]} {
    %c0 = arith.constant 0 : index
    %c0_0 = arith.constant 0 : index
    %0 = vector.load %arg1[%c0, %c0_0] : memref<8x128xf32, #tpu.memory_space<vmem>>, vector<8x128xf32>
    %cst = arith.constant dense<0xFF800000> : vector<8xf32>
    %1 = vector.multi_reduction <maximumf>, %0, %cst [1] : vector<8x128xf32> to vector<8xf32>
    %2 = vector.shape_cast %1 : vector<8xf32> to vector<8x1xf32>
    %3 = vector.broadcast %2 : vector<8x1xf32> to vector<8x128xf32>
    %4 = arith.subf %0, %3 : vector<8x128xf32>
    %5 = math.exp %4 : vector<8x128xf32>
    %cst_1 = arith.constant dense<0.000000e+00> : vector<8xf32>
    %6 = vector.multi_reduction <add>, %5, %cst_1 [1] : vector<8x128xf32> to vector<8xf32>
    %7 = vector.shape_cast %6 : vector<8xf32> to vector<8x1xf32>
    %8 = math.log %7 : vector<8x1xf32>
    %9 = arith.addf %2, %8 : vector<8x1xf32>
    %cst_2 = arith.constant dense<0.000000e+00> : vector<8xf32>
    %10 = vector.multi_reduction <add>, %0, %cst_2 [1] : vector<8x128xf32> to vector<8xf32>
    %11 = vector.shape_cast %10 : vector<8xf32> to vector<8x1xf32>
    %cst_3 = arith.constant 1.280000e+02 : f32
    %12 = vector.broadcast %cst_3 : f32 to vector<8x1xf32>
    %13 = arith.mulf %12, %9 : vector<8x1xf32>
    %14 = arith.subf %13, %11 : vector<8x1xf32>
    %c8_i32 = arith.constant 8 : i32
    %15 = arith.muli %arg0, %c8_i32 : i32
    %16 = tpu.iota {dimensions = array<i32: 0>} : vector<8x1xi32>
    %17 = vector.broadcast %15 : i32 to vector<8x1xi32>
    %18 = arith.addi %17, %16 : vector<8x1xi32>
    %c8_i32_4 = arith.constant 8 : i32
    %19 = vector.broadcast %c8_i32_4 : i32 to vector<8x1xi32>
    %20 = arith.cmpi slt, %18, %19 : vector<8x1xi32>
    %cst_5 = arith.constant 0.000000e+00 : f32
    %21 = vector.broadcast %cst_5 : f32 to vector<8x1xf32>
    %22 = arith.select %20, %14, %21 : vector<8x1xi1>, vector<8x1xf32>
    %23 = vector.shape_cast %22 : vector<8x1xf32> to vector<1x8x1xf32>
    %cst_6 = arith.constant dense<0.000000e+00> : vector<1xf32>
    %24 = vector.multi_reduction <add>, %23, %cst_6 [1, 2] : vector<1x8x1xf32> to vector<1xf32>
    %25 = vector.shape_cast %24 : vector<1xf32> to vector<1x1x1xf32>
    %26 = vector.extract %25[0, 0, 0] : f32 from vector<1x1x1xf32>
    %27 = vector.broadcast %26 : f32 to vector<1x1x1xf32>
    %c0_7 = arith.constant 0 : index
    %c0_8 = arith.constant 0 : index
    %c0_9 = arith.constant 0 : index
    %28 = vector.load %arg2[%c0_7, %c0_8, %c0_9] : memref<1x1x1xf32, #tpu.memory_space<vmem>>, vector<1x1x1xf32>
    tpu.vector_store %arg2[%c0_7, %c0_8, %c0_9], %27 {strides = array<i32>} : memref<1x1x1xf32, #tpu.memory_space<vmem>>, vector<1x1x1xf32>,
    return
  }
  func.func @transform_0(%arg0: i32) -> (i32, i32) {
    %c0_i32 = arith.constant 0 : i32
    %c0_i32_0 = arith.constant 0 : i32
    return %arg0, %c0_i32 : i32, i32
  }
  func.func @transform_1(%arg0: i32) -> (i32, i32, i32) {
    %c0_i32 = arith.constant 0 : i32
    %c0_i32_0 = arith.constant 0 : i32
    %c0_i32_1 = arith.constant 0 : i32
    return %arg0, %c0_i32, %c0_i32_0 : i32, i32, i32
  }
}

</mosaic_0001>

<llo_original>
// kernel: tpu_custom_call.1
$region0: #{tpu_custom_call.1}
  #allocation0 [shape = 'u32[]', space=smem, size = 0x4, offset = 0x4, fixed_abs, tag = 'smem constant byte address 0x4 - core index']
  #allocation1 [shape = 'u32[144,128]{1,0:T(1,128)}', space=vmem, size = 0x12000, scoped, tag = 'internal scratch']
  %s0 = inlined_call_operand.hbm [shape: f32[8,128], index: 0, kind: input, shape index: {}]
  %s1 = inlined_call_operand.hbm [shape: f32[1,1,1], index: 1, kind: output, shape index: {}]
  %s2 = sld [smem:[#allocation0]]
  $region18: #{tpu_custom_call.1} parent=0
    _
  %s4 = ssub.s32 1, %s2
  %s5 = scalar_select 0, %s4, %s2
  $region1: #{tpu_custom_call.1} parent=0
    #allocation2 [shape = 'u8[4096]{0}', space=vmem, size = 0x1000, scoped, tag = 'input window, operand 0, single buffered']
    #allocation3 [shape = 's32[1]{0}', space=sflag, size = 0x4, scoped, tag = 'scoped memory for tpu_custom_call.1']
    #allocation4 [shape = 's32[1]{0}', space=sflag, size = 0x4, scoped, tag = 'scoped memory for tpu_custom_call.1']
    #allocation5 [shape = 'u8[512]{0}', space=vmem, size = 0x400, scoped, tag = 'output window, operand 0, single buffered']
    %6 = vsyncpa [#allocation3], 0
    %7 = vsyncpa [#allocation4], 0
    // Predicated region
    $region2: #{tpu_custom_call.1} parent=1 // pred_check
      _
    $region3: #{tpu_custom_call.1} parent=1 // pred_check_branch
      %9 = sbr.rel (0) target = $region5
    $region4: #{tpu_custom_call.1} parent=1 // pred_region
      %s11 = ssub.s32 128, 128
      %12 = vsyncadd [#allocation3], %s11
      %s14 = sshll.u32 [#allocation2], 4
      %s15 = int_to_ptr.vmem [resolvable:$true] %s14
      %17 = dma.hbm_to_vmem [thread:$0]  %s0, 128, %s15, [#allocation3]
    $region5: #{tpu_custom_call.1} parent=1 // pred_fallthru
      _
    // Predicated region
    $region6: #{tpu_custom_call.1} parent=1 // pred_check
      _
    $region7: #{tpu_custom_call.1} parent=1 // pred_check_branch
      %19 = sbr.rel (0) target = $region9
    $region8: #{tpu_custom_call.1} parent=1 // pred_region
      %20 = dma.done [#allocation3], 128
    $region9: #{tpu_custom_call.1} parent=1 // pred_fallthru
      _
    %v21 = vld [vmem:[#allocation2] sm:$0xff]
    %22 = vmax.xlane.f32.xlu0 %v21
    %v23 = vpop.xlane.xlu0 %22
    %v24 = vsub.f32 %v21, %v23
    %v25 = vmul.f32 %v24, 1.442695
    %v26 = vpow.pop %v25
    %27 = vadd.xlane.f32.xlu0 %v26
    %v28 = vpop.xlane.xlu0 %27
    %v29 = vlog2.pop %v28
    %v30 = vmul.f32 %v29, 0.6931472
    %v31 = vadd.f32 %v23, %v30
    %32 = vadd.xlane.f32.xlu0 %v21
    %v33 = vpop.xlane.xlu0 %32
    %v34 = vmul.f32 %v31, 128.0
    %v35 = vsub.f32 %v34, %v33
    %s36 = smul.u32 0, 8
    %v37 = vlaneseq
    %v38 = vshrl.u32 %v37, 7
    %v39 = vstv %s36
    %v40 = vadd.s32 %v39, %v38
    %vm41 = vcmp.lt.s32.totalorder %v40, 8
    %v42 = vsel %vm41, %v35, 0.0
    %vm43 = vcmask 7168
    %v44 = vsel %vm43, %v42, 0.0
    %45 = vadd.xlane.f32.xlu0 %v44
    %v46 = vpop.xlane.xlu0 %45
    %v47 = vrot.slane %v46, 4
    %v48 = vadd.f32 %v46, %v47
    %v49 = vrot.slane %v48, 2
    %v50 = vadd.f32 %v48, %v49
    %v51 = vrot.slane %v50, 1
    %v52 = vadd.f32 %v50, %v51
    %s53 = vtos %v52
    %v54 = vstv %s53
    %vm55 = vcmask 0
    %56 = vst.msk [vmem:[#allocation5] sm:$0x1] %vm55, %v54
    // Predicated region
    $region10: #{tpu_custom_call.1} parent=1 // pred_check
      _
    $region11: #{tpu_custom_call.1} parent=1 // pred_check_branch
      %58 = sbr.rel (0) target = $region13
    $region12: #{tpu_custom_call.1} parent=1 // pred_region
      %s60 = ssub.s32 16, 16
      %61 = vsyncadd [#allocation4], %s60
      %s63 = sshll.u32 [#allocation5], 4
      %s64 = int_to_ptr.vmem [resolvable:$true] %s63
      %66 = dma.vmem_to_hbm [thread:$0]  %s64, 16, %s1, [#allocation4]
    $region13: #{tpu_custom_call.1} parent=1 // pred_fallthru
      _
    // Predicated region
    $region14: #{tpu_custom_call.1} parent=1 // pred_check
      _
    $region15: #{tpu_custom_call.1} parent=1 // pred_check_branch
      %68 = sbr.rel (0) target = $region17
    $region16: #{tpu_custom_call.1} parent=1 // pred_region
      %69 = dma.done [#allocation4], 16
    $region17: #{tpu_custom_call.1} parent=1 // pred_fallthru
      _
    %70 = vsyncpa [#allocation3], 1
    %71 = vsyncpa [#allocation4], 1

</llo_original>
